<compile_context>
chip_gen: v6e
topology: v6e:2x2x1
jax: 0.10.0
libtpu: 0.0.40
codegen_flags: <defaults>
</compile_context>

<pallas_src>
import functools

import jax
import jax.numpy as jnp
from jax.experimental import pallas as pl
from jax.experimental.pallas import tpu as pltpu

EPS = 1e-5
NEG_SLOPE = 0.1


def _leaky(v):
    # LeakyReLU(0.1): max(v, 0.1*v) is exact because 0 < NEG_SLOPE < 1.
    return jnp.maximum(v, NEG_SLOPE * v)


def _residual_block_kernel(x_ref, w_ref, p_ref, o_ref, *, C, HW):
    """x_ref: (D, C*HW) f32 VMEM; w_ref: (2*C*C,) f32 SMEM (w1 then w2, row-major);
    p_ref: (D, 4) f32 VMEM with columns [g1, b1, g2, b2]; o_ref: (D, C*HW) f32 VMEM."""
    inv_n = 1.0 / float(C * HW)

    g1 = p_ref[:, 0:1]
    b1 = p_ref[:, 1:2]
    g2 = p_ref[:, 2:3]
    b2 = p_ref[:, 3:4]

    # Load x once as C lane-aligned blocks of shape (D, HW); everything below
    # stays on these vreg-resident blocks (no concatenates, no VMEM temps).
    xb = [x_ref[:, i * HW:(i + 1) * HW] for i in range(C)]

    def channel_mix(blocks, w_off):
        # 1x1x1 conv (no bias) + LeakyReLU: out[o] = leaky(sum_i w[o,i] * in[i]).
        # Pure-VPU unrolled broadcast-FMA; weights are scalars read from SMEM.
        outs = []
        for o in range(C):
            acc = w_ref[w_off + o * C] * blocks[0]
            for i in range(1, C):
                acc = acc + w_ref[w_off + o * C + i] * blocks[i]
            outs.append(_leaky(acc))
        return outs

    def bn_scale_shift(blocks, g, b):
        # Training-mode BatchNorm2d: per-d stats over (C, H, W) == per row here.
        # Single pass (sum & sum-of-squares); gamma/beta folded into one
        # per-row scale/shift so the apply is a single FMA per block.
        s1 = jnp.sum(blocks[0], axis=1, keepdims=True)            # (D, 1)
        s2 = jnp.sum(blocks[0] * blocks[0], axis=1, keepdims=True)
        for i in range(1, C):
            s1 = s1 + jnp.sum(blocks[i], axis=1, keepdims=True)
            s2 = s2 + jnp.sum(blocks[i] * blocks[i], axis=1, keepdims=True)
        m = s1 * inv_n
        var = s2 * inv_n - m * m                                   # biased variance
        scale = g * jax.lax.rsqrt(var + EPS)                       # EUP slot
        shift = b - m * scale
        return scale, shift

    a0 = [_leaky(v) for v in xb]                                   # act(x)
    h1 = channel_mix(a0, 0)                                        # conv1 + LeakyReLU
    sc1, sh1 = bn_scale_shift(h1, g1, b1)
    a1 = [_leaky(v * sc1 + sh1) for v in h1]                       # act(bn1(.))
    h2 = channel_mix(a1, C * C)                                    # conv2 + LeakyReLU
    sc2, sh2 = bn_scale_shift(h2, g2, b2)
    for i in range(C):                                             # bn2(.) + residual
        o_ref[:, i * HW:(i + 1) * HW] = h2[i] * sc2 + sh2 + xb[i]


@jax.jit
def residual_block(x, w1, w2, g1, b1, g2, b2):
    """x: (C, D, H, W) f32; w1/w2: (C, C) 1x1x1 conv weights (bias=False);
    g*/b*: (D,) BatchNorm2d affine params (D == channels)."""
    C, D, H, W = x.shape
    HW = H * W

    # Lane-dense kernel layout: (D, C*HW); last dim is a multiple of 128.
    xt = jnp.transpose(x, (1, 0, 2, 3)).reshape(D, C * HW).astype(jnp.float32)
    # Pack both convs' weights into one tiny flat SMEM array (scalar reads).
    w_flat = jnp.concatenate([w1.reshape(-1), w2.reshape(-1)]).astype(jnp.float32)
    # Pack the four BN affine vectors into a single small VMEM array.
    params = jnp.stack([g1, b1, g2, b2], axis=1).astype(jnp.float32)      # (D, 4)

    kernel = functools.partial(_residual_block_kernel, C=C, HW=HW)
    out = pl.pallas_call(
        kernel,
        out_shape=jax.ShapeDtypeStruct((D, C * HW), jnp.float32),
        in_specs=[
            pl.BlockSpec(memory_space=pltpu.MemorySpace.VMEM),
            pl.BlockSpec(memory_space=pltpu.MemorySpace.SMEM),
            pl.BlockSpec(memory_space=pltpu.MemorySpace.VMEM),
        ],
        out_specs=pl.BlockSpec(memory_space=pltpu.MemorySpace.VMEM),
    )(xt, w_flat, params)

    return jnp.transpose(out.reshape(D, C, H, W), (1, 0, 2, 3))


def residual_block_ref(x, w1, w2, g1, b1, g2, b2):
    """Pure-JAX reference mirroring the PyTorch forward (training-mode BN)."""
    def leaky(v):
        return jnp.where(v >= 0, v, NEG_SLOPE * v)

    def bn(h, g, b):
        m = jnp.mean(h, axis=(0, 2, 3), keepdims=True)
        v = jnp.mean((h - m) ** 2, axis=(0, 2, 3), keepdims=True)
        return (h - m) / jnp.sqrt(v + EPS) * g.reshape(1, -1, 1, 1) + b.reshape(1, -1, 1, 1)

    a0 = leaky(x)
    h1 = leaky(jnp.einsum('oi,idhw->odhw', w1, a0))
    a1 = leaky(bn(h1, g1, b1))
    h2 = leaky(jnp.einsum('oi,idhw->odhw', w2, a1))
    return bn(h2, g2, b2) + x


if __name__ == "__main__":
    channels = 4           # conv channels; BatchNorm2d(channels) forces D == channels
    D, H, W = channels, 16, 16

    key = jax.random.PRNGKey(0)
    kx, k1, k2, kg1, kb1, kg2, kb2 = jax.random.split(key, 7)

    x = jax.random.normal(kx, (channels, D, H, W), dtype=jnp.float32)
    # Conv3d weights are (C, C, 1, 1, 1) with bias=False -> use the (C, C) matrix.
    w1 = jax.random.normal(k1, (channels, channels), dtype=jnp.float32) * 0.3
    w2 = jax.random.normal(k2, (channels, channels), dtype=jnp.float32) * 0.3
    # BatchNorm affine params (PyTorch init is gamma=1, beta=0; perturb deterministically).
    g1 = 1.0 + 0.1 * jax.random.normal(kg1, (D,), dtype=jnp.float32)
    b1 = 0.1 * jax.random.normal(kb1, (D,), dtype=jnp.float32)
    g2 = 1.0 + 0.1 * jax.random.normal(kg2, (D,), dtype=jnp.float32)
    b2 = 0.1 * jax.random.normal(kb2, (D,), dtype=jnp.float32)

    out = residual_block(x, w1, w2, g1, b1, g2, b2)
    out = jax.block_until_ready(out)

    ref = residual_block_ref(x, w1, w2, g1, b1, g2, b2)
    assert out.shape == x.shape
    assert jnp.allclose(out, ref, atol=1e-4, rtol=1e-4), "mismatch vs JAX reference"

    print("KERNEL_OK")
</pallas_src>

<mosaic_0001>
module attributes {stable_mosaic.version = 11 : i64} {
  func.func @_residual_block_kernel(%arg0: memref<4x1024xf32, #tpu.memory_space<vmem>>, %arg1: memref<32xf32, #tpu.memory_space<smem>>, %arg2: memref<4x4xf32, #tpu.memory_space<vmem>>, %arg3: memref<4x1024xf32, #tpu.memory_space<vmem>>) attributes {dimension_semantics = [], scalar_prefetch = 0 : i64, scratch_operands = 0 : i64, tpu.core_type = #tpu.core_type<tc>} {
    %c0 = arith.constant 0 : index
    %c0_0 = arith.constant 0 : index
    %0 = vector.load %arg2[%c0, %c0_0] : memref<4x4xf32, #tpu.memory_space<vmem>>, vector<4x1xf32>
    %c0_1 = arith.constant 0 : index
    %c1 = arith.constant 1 : index
    %1 = vector.load %arg2[%c0_1, %c1] : memref<4x4xf32, #tpu.memory_space<vmem>>, vector<4x1xf32>
    %c0_2 = arith.constant 0 : index
    %c2 = arith.constant 2 : index
    %2 = vector.load %arg2[%c0_2, %c2] : memref<4x4xf32, #tpu.memory_space<vmem>>, vector<4x1xf32>
    %c0_3 = arith.constant 0 : index
    %c3 = arith.constant 3 : index
    %3 = vector.load %arg2[%c0_3, %c3] : memref<4x4xf32, #tpu.memory_space<vmem>>, vector<4x1xf32>
    %c0_4 = arith.constant 0 : index
    %c0_5 = arith.constant 0 : index
    %4 = vector.load %arg0[%c0_4, %c0_5] : memref<4x1024xf32, #tpu.memory_space<vmem>>, vector<4x256xf32>
    %c0_6 = arith.constant 0 : index
    %c256 = arith.constant 256 : index
    %5 = vector.load %arg0[%c0_6, %c256] : memref<4x1024xf32, #tpu.memory_space<vmem>>, vector<4x256xf32>
    %c0_7 = arith.constant 0 : index
    %c512 = arith.constant 512 : index
    %6 = vector.load %arg0[%c0_7, %c512] : memref<4x1024xf32, #tpu.memory_space<vmem>>, vector<4x256xf32>
    %c0_8 = arith.constant 0 : index
    %c768 = arith.constant 768 : index
    %7 = vector.load %arg0[%c0_8, %c768] : memref<4x1024xf32, #tpu.memory_space<vmem>>, vector<4x256xf32>
    %cst = arith.constant 1.000000e-01 : f32
    %8 = vector.broadcast %cst : f32 to vector<4x256xf32>
    %9 = arith.mulf %8, %4 : vector<4x256xf32>
    %10 = arith.maximumf %4, %9 : vector<4x256xf32>
    %cst_9 = arith.constant 1.000000e-01 : f32
    %11 = vector.broadcast %cst_9 : f32 to vector<4x256xf32>
    %12 = arith.mulf %11, %5 : vector<4x256xf32>
    %13 = arith.maximumf %5, %12 : vector<4x256xf32>
    %cst_10 = arith.constant 1.000000e-01 : f32
    %14 = vector.broadcast %cst_10 : f32 to vector<4x256xf32>
    %15 = arith.mulf %14, %6 : vector<4x256xf32>
    %16 = arith.maximumf %6, %15 : vector<4x256xf32>
    %cst_11 = arith.constant 1.000000e-01 : f32
    %17 = vector.broadcast %cst_11 : f32 to vector<4x256xf32>
    %18 = arith.mulf %17, %7 : vector<4x256xf32>
    %19 = arith.maximumf %7, %18 : vector<4x256xf32>
    %c0_12 = arith.constant 0 : index
    %20 = memref.load %arg1[%c0_12] : memref<32xf32, #tpu.memory_space<smem>>
    %21 = vector.broadcast %20 : f32 to vector<4x256xf32>
    %22 = arith.mulf %21, %10 : vector<4x256xf32>
    %c1_13 = arith.constant 1 : index
    %23 = memref.load %arg1[%c1_13] : memref<32xf32, #tpu.memory_space<smem>>
    %24 = vector.broadcast %23 : f32 to vector<4x256xf32>
    %25 = arith.mulf %24, %13 : vector<4x256xf32>
    %26 = arith.addf %22, %25 : vector<4x256xf32>
    %c2_14 = arith.constant 2 : index
    %27 = memref.load %arg1[%c2_14] : memref<32xf32, #tpu.memory_space<smem>>
    %28 = vector.broadcast %27 : f32 to vector<4x256xf32>
    %29 = arith.mulf %28, %16 : vector<4x256xf32>
    %30 = arith.addf %26, %29 : vector<4x256xf32>
    %c3_15 = arith.constant 3 : index
    %31 = memref.load %arg1[%c3_15] : memref<32xf32, #tpu.memory_space<smem>>
    %32 = vector.broadcast %31 : f32 to vector<4x256xf32>
    %33 = arith.mulf %32, %19 : vector<4x256xf32>
    %34 = arith.addf %30, %33 : vector<4x256xf32>
    %cst_16 = arith.constant 1.000000e-01 : f32
    %35 = vector.broadcast %cst_16 : f32 to vector<4x256xf32>
    %36 = arith.mulf %35, %34 : vector<4x256xf32>
    %37 = arith.maximumf %34, %36 : vector<4x256xf32>
    %c4 = arith.constant 4 : index
    %38 = memref.load %arg1[%c4] : memref<32xf32, #tpu.memory_space<smem>>
    %39 = vector.broadcast %38 : f32 to vector<4x256xf32>
    %40 = arith.mulf %39, %10 : vector<4x256xf32>
    %c5 = arith.constant 5 : index
    %41 = memref.load %arg1[%c5] : memref<32xf32, #tpu.memory_space<smem>>
    %42 = vector.broadcast %41 : f32 to vector<4x256xf32>
    %43 = arith.mulf %42, %13 : vector<4x256xf32>
    %44 = arith.addf %40, %43 : vector<4x256xf32>
    %c6 = arith.constant 6 : index
    %45 = memref.load %arg1[%c6] : memref<32xf32, #tpu.memory_space<smem>>
    %46 = vector.broadcast %45 : f32 to vector<4x256xf32>
    %47 = arith.mulf %46, %16 : vector<4x256xf32>
    %48 = arith.addf %44, %47 : vector<4x256xf32>
    %c7 = arith.constant 7 : index
    %49 = memref.load %arg1[%c7] : memref<32xf32, #tpu.memory_space<smem>>
    %50 = vector.broadcast %49 : f32 to vector<4x256xf32>
    %51 = arith.mulf %50, %19 : vector<4x256xf32>
    %52 = arith.addf %48, %51 : vector<4x256xf32>
    %cst_17 = arith.constant 1.000000e-01 : f32
    %53 = vector.broadcast %cst_17 : f32 to vector<4x256xf32>
    %54 = arith.mulf %53, %52 : vector<4x256xf32>
    %55 = arith.maximumf %52, %54 : vector<4x256xf32>
    %c8 = arith.constant 8 : index
    %56 = memref.load %arg1[%c8] : memref<32xf32, #tpu.memory_space<smem>>
    %57 = vector.broadcast %56 : f32 to vector<4x256xf32>
    %58 = arith.mulf %57, %10 : vector<4x256xf32>
    %c9 = arith.constant 9 : index
    %59 = memref.load %arg1[%c9] : memref<32xf32, #tpu.memory_space<smem>>
    %60 = vector.broadcast %59 : f32 to vector<4x256xf32>
    %61 = arith.mulf %60, %13 : vector<4x256xf32>
    %62 = arith.addf %58, %61 : vector<4x256xf32>
    %c10 = arith.constant 10 : index
    %63 = memref.load %arg1[%c10] : memref<32xf32, #tpu.memory_space<smem>>
    %64 = vector.broadcast %63 : f32 to vector<4x256xf32>
    %65 = arith.mulf %64, %16 : vector<4x256xf32>
    %66 = arith.addf %62, %65 : vector<4x256xf32>
    %c11 = arith.constant 11 : index
    %67 = memref.load %arg1[%c11] : memref<32xf32, #tpu.memory_space<smem>>
    %68 = vector.broadcast %67 : f32 to vector<4x256xf32>
    %69 = arith.mulf %68, %19 : vector<4x256xf32>
    %70 = arith.addf %66, %69 : vector<4x256xf32>
    %cst_18 = arith.constant 1.000000e-01 : f32
    %71 = vector.broadcast %cst_18 : f32 to vector<4x256xf32>
    %72 = arith.mulf %71, %70 : vector<4x256xf32>
    %73 = arith.maximumf %70, %72 : vector<4x256xf32>
    %c12 = arith.constant 12 : index
    %74 = memref.load %arg1[%c12] : memref<32xf32, #tpu.memory_space<smem>>
    %75 = vector.broadcast %74 : f32 to vector<4x256xf32>
    %76 = arith.mulf %75, %10 : vector<4x256xf32>
    %c13 = arith.constant 13 : index
    %77 = memref.load %arg1[%c13] : memref<32xf32, #tpu.memory_space<smem>>
    %78 = vector.broadcast %77 : f32 to vector<4x256xf32>
    %79 = arith.mulf %78, %13 : vector<4x256xf32>
    %80 = arith.addf %76, %79 : vector<4x256xf32>
    %c14 = arith.constant 14 : index
    %81 = memref.load %arg1[%c14] : memref<32xf32, #tpu.memory_space<smem>>
    %82 = vector.broadcast %81 : f32 to vector<4x256xf32>
    %83 = arith.mulf %82, %16 : vector<4x256xf32>
    %84 = arith.addf %80, %83 : vector<4x256xf32>
    %c15 = arith.constant 15 : index
    %85 = memref.load %arg1[%c15] : memref<32xf32, #tpu.memory_space<smem>>
    %86 = vector.broadcast %85 : f32 to vector<4x256xf32>
    %87 = arith.mulf %86, %19 : vector<4x256xf32>
    %88 = arith.addf %84, %87 : vector<4x256xf32>
    %cst_19 = arith.constant 1.000000e-01 : f32
    %89 = vector.broadcast %cst_19 : f32 to vector<4x256xf32>
    %90 = arith.mulf %89, %88 : vector<4x256xf32>
    %91 = arith.maximumf %88, %90 : vector<4x256xf32>
    %cst_20 = arith.constant dense<0.000000e+00> : vector<4xf32>
    %92 = vector.multi_reduction <add>, %37, %cst_20 [1] : vector<4x256xf32> to vector<4xf32>
    %93 = vector.shape_cast %92 : vector<4xf32> to vector<4x1xf32>
    %94 = arith.mulf %37, %37 : vector<4x256xf32>
    %cst_21 = arith.constant dense<0.000000e+00> : vector<4xf32>
    %95 = vector.multi_reduction <add>, %94, %cst_21 [1] : vector<4x256xf32> to vector<4xf32>
    %96 = vector.shape_cast %95 : vector<4xf32> to vector<4x1xf32>
    %cst_22 = arith.constant dense<0.000000e+00> : vector<4xf32>
    %97 = vector.multi_reduction <add>, %55, %cst_22 [1] : vector<4x256xf32> to vector<4xf32>
    %98 = vector.shape_cast %97 : vector<4xf32> to vector<4x1xf32>
    %99 = arith.addf %93, %98 : vector<4x1xf32>
    %100 = arith.mulf %55, %55 : vector<4x256xf32>
    %cst_23 = arith.constant dense<0.000000e+00> : vector<4xf32>
    %101 = vector.multi_reduction <add>, %100, %cst_23 [1] : vector<4x256xf32> to vector<4xf32>
    %102 = vector.shape_cast %101 : vector<4xf32> to vector<4x1xf32>
    %103 = arith.addf %96, %102 : vector<4x1xf32>
    %cst_24 = arith.constant dense<0.000000e+00> : vector<4xf32>
    %104 = vector.multi_reduction <add>, %73, %cst_24 [1] : vector<4x256xf32> to vector<4xf32>
    %105 = vector.shape_cast %104 : vector<4xf32> to vector<4x1xf32>
    %106 = arith.addf %99, %105 : vector<4x1xf32>
    %107 = arith.mulf %73, %73 : vector<4x256xf32>
    %cst_25 = arith.constant dense<0.000000e+00> : vector<4xf32>
    %108 = vector.multi_reduction <add>, %107, %cst_25 [1] : vector<4x256xf32> to vector<4xf32>
    %109 = vector.shape_cast %108 : vector<4xf32> to vector<4x1xf32>
    %110 = arith.addf %103, %109 : vector<4x1xf32>
    %cst_26 = arith.constant dense<0.000000e+00> : vector<4xf32>
    %111 = vector.multi_reduction <add>, %91, %cst_26 [1] : vector<4x256xf32> to vector<4xf32>
    %112 = vector.shape_cast %111 : vector<4xf32> to vector<4x1xf32>
    %113 = arith.addf %106, %112 : vector<4x1xf32>
    %114 = arith.mulf %91, %91 : vector<4x256xf32>
    %cst_27 = arith.constant dense<0.000000e+00> : vector<4xf32>
    %115 = vector.multi_reduction <add>, %114, %cst_27 [1] : vector<4x256xf32> to vector<4xf32>
    %116 = vector.shape_cast %115 : vector<4xf32> to vector<4x1xf32>
    %117 = arith.addf %110, %116 : vector<4x1xf32>
    %cst_28 = arith.constant 9.765625E-4 : f32
    %118 = vector.broadcast %cst_28 : f32 to vector<4x1xf32>
    %119 = arith.mulf %113, %118 : vector<4x1xf32>
    %cst_29 = arith.constant 9.765625E-4 : f32
    %120 = vector.broadcast %cst_29 : f32 to vector<4x1xf32>
    %121 = arith.mulf %117, %120 : vector<4x1xf32>
    %122 = arith.mulf %119, %119 : vector<4x1xf32>
    %123 = arith.subf %121, %122 : vector<4x1xf32>
    %cst_30 = arith.constant 9.99999974E-6 : f32
    %124 = vector.broadcast %cst_30 : f32 to vector<4x1xf32>
    %125 = arith.addf %123, %124 : vector<4x1xf32>
    %126 = math.rsqrt %125 : vector<4x1xf32>
    %127 = arith.mulf %0, %126 : vector<4x1xf32>
    %128 = arith.mulf %119, %127 : vector<4x1xf32>
    %129 = arith.subf %1, %128 : vector<4x1xf32>
    %130 = vector.broadcast %127 : vector<4x1xf32> to vector<4x256xf32>
    %131 = arith.mulf %37, %130 : vector<4x256xf32>
    %132 = vector.broadcast %129 : vector<4x1xf32> to vector<4x256xf32>
    %133 = arith.addf %131, %132 : vector<4x256xf32>
    %cst_31 = arith.constant 1.000000e-01 : f32
    %134 = vector.broadcast %cst_31 : f32 to vector<4x256xf32>
    %135 = arith.mulf %134, %133 : vector<4x256xf32>
    %136 = arith.maximumf %133, %135 : vector<4x256xf32>
    %137 = vector.broadcast %127 : vector<4x1xf32> to vector<4x256xf32>
    %138 = arith.mulf %55, %137 : vector<4x256xf32>
    %139 = vector.broadcast %129 : vector<4x1xf32> to vector<4x256xf32>
    %140 = arith.addf %138, %139 : vector<4x256xf32>
    %cst_32 = arith.constant 1.000000e-01 : f32
    %141 = vector.broadcast %cst_32 : f32 to vector<4x256xf32>
    %142 = arith.mulf %141, %140 : vector<4x256xf32>
    %143 = arith.maximumf %140, %142 : vector<4x256xf32>
    %144 = vector.broadcast %127 : vector<4x1xf32> to vector<4x256xf32>
    %145 = arith.mulf %73, %144 : vector<4x256xf32>
    %146 = vector.broadcast %129 : vector<4x1xf32> to vector<4x256xf32>
    %147 = arith.addf %145, %146 : vector<4x256xf32>
    %cst_33 = arith.constant 1.000000e-01 : f32
    %148 = vector.broadcast %cst_33 : f32 to vector<4x256xf32>
    %149 = arith.mulf %148, %147 : vector<4x256xf32>
    %150 = arith.maximumf %147, %149 : vector<4x256xf32>
    %151 = vector.broadcast %127 : vector<4x1xf32> to vector<4x256xf32>
    %152 = arith.mulf %91, %151 : vector<4x256xf32>
    %153 = vector.broadcast %129 : vector<4x1xf32> to vector<4x256xf32>
    %154 = arith.addf %152, %153 : vector<4x256xf32>
    %cst_34 = arith.constant 1.000000e-01 : f32
    %155 = vector.broadcast %cst_34 : f32 to vector<4x256xf32>
    %156 = arith.mulf %155, %154 : vector<4x256xf32>
    %157 = arith.maximumf %154, %156 : vector<4x256xf32>
    %c16 = arith.constant 16 : index
    %158 = memref.load %arg1[%c16] : memref<32xf32, #tpu.memory_space<smem>>
    %159 = vector.broadcast %158 : f32 to vector<4x256xf32>
    %160 = arith.mulf %159, %136 : vector<4x256xf32>
    %c17 = arith.constant 17 : index
    %161 = memref.load %arg1[%c17] : memref<32xf32, #tpu.memory_space<smem>>
    %162 = vector.broadcast %161 : f32 to vector<4x256xf32>
    %163 = arith.mulf %162, %143 : vector<4x256xf32>
    %164 = arith.addf %160, %163 : vector<4x256xf32>
    %c18 = arith.constant 18 : index
    %165 = memref.load %arg1[%c18] : memref<32xf32, #tpu.memory_space<smem>>
    %166 = vector.broadcast %165 : f32 to vector<4x256xf32>
    %167 = arith.mulf %166, %150 : vector<4x256xf32>
    %168 = arith.addf %164, %167 : vector<4x256xf32>
    %c19 = arith.constant 19 : index
    %169 = memref.load %arg1[%c19] : memref<32xf32, #tpu.memory_space<smem>>
    %170 = vector.broadcast %169 : f32 to vector<4x256xf32>
    %171 = arith.mulf %170, %157 : vector<4x256xf32>
    %172 = arith.addf %168, %171 : vector<4x256xf32>
    %cst_35 = arith.constant 1.000000e-01 : f32
    %173 = vector.broadcast %cst_35 : f32 to vector<4x256xf32>
    %174 = arith.mulf %173, %172 : vector<4x256xf32>
    %175 = arith.maximumf %172, %174 : vector<4x256xf32>
    %c20 = arith.constant 20 : index
    %176 = memref.load %arg1[%c20] : memref<32xf32, #tpu.memory_space<smem>>
    %177 = vector.broadcast %176 : f32 to vector<4x256xf32>
    %178 = arith.mulf %177, %136 : vector<4x256xf32>
    %c21 = arith.constant 21 : index
    %179 = memref.load %arg1[%c21] : memref<32xf32, #tpu.memory_space<smem>>
    %180 = vector.broadcast %179 : f32 to vector<4x256xf32>
    %181 = arith.mulf %180, %143 : vector<4x256xf32>
    %182 = arith.addf %178, %181 : vector<4x256xf32>
    %c22 = arith.constant 22 : index
    %183 = memref.load %arg1[%c22] : memref<32xf32, #tpu.memory_space<smem>>
    %184 = vector.broadcast %183 : f32 to vector<4x256xf32>
    %185 = arith.mulf %184, %150 : vector<4x256xf32>
    %186 = arith.addf %182, %185 : vector<4x256xf32>
    %c23 = arith.constant 23 : index
    %187 = memref.load %arg1[%c23] : memref<32xf32, #tpu.memory_space<smem>>
    %188 = vector.broadcast %187 : f32 to vector<4x256xf32>
    %189 = arith.mulf %188, %157 : vector<4x256xf32>
    %190 = arith.addf %186, %189 : vector<4x256xf32>
    %cst_36 = arith.constant 1.000000e-01 : f32
    %191 = vector.broadcast %cst_36 : f32 to vector<4x256xf32>
    %192 = arith.mulf %191, %190 : vector<4x256xf32>
    %193 = arith.maximumf %190, %192 : vector<4x256xf32>
    %c24 = arith.constant 24 : index
    %194 = memref.load %arg1[%c24] : memref<32xf32, #tpu.memory_space<smem>>
    %195 = vector.broadcast %194 : f32 to vector<4x256xf32>
    %196 = arith.mulf %195, %136 : vector<4x256xf32>
    %c25 = arith.constant 25 : index
    %197 = memref.load %arg1[%c25] : memref<32xf32, #tpu.memory_space<smem>>
    %198 = vector.broadcast %197 : f32 to vector<4x256xf32>
    %199 = arith.mulf %198, %143 : vector<4x256xf32>
    %200 = arith.addf %196, %199 : vector<4x256xf32>
    %c26 = arith.constant 26 : index
    %201 = memref.load %arg1[%c26] : memref<32xf32, #tpu.memory_space<smem>>
    %202 = vector.broadcast %201 : f32 to vector<4x256xf32>
    %203 = arith.mulf %202, %150 : vector<4x256xf32>
    %204 = arith.addf %200, %203 : vector<4x256xf32>
    %c27 = arith.constant 27 : index
    %205 = memref.load %arg1[%c27] : memref<32xf32, #tpu.memory_space<smem>>
    %206 = vector.broadcast %205 : f32 to vector<4x256xf32>
    %207 = arith.mulf %206, %157 : vector<4x256xf32>
    %208 = arith.addf %204, %207 : vector<4x256xf32>
    %cst_37 = arith.constant 1.000000e-01 : f32
    %209 = vector.broadcast %cst_37 : f32 to vector<4x256xf32>
    %210 = arith.mulf %209, %208 : vector<4x256xf32>
    %211 = arith.maximumf %208, %210 : vector<4x256xf32>
    %c28 = arith.constant 28 : index
    %212 = memref.load %arg1[%c28] : memref<32xf32, #tpu.memory_space<smem>>
    %213 = vector.broadcast %212 : f32 to vector<4x256xf32>
    %214 = arith.mulf %213, %136 : vector<4x256xf32>
    %c29 = arith.constant 29 : index
    %215 = memref.load %arg1[%c29] : memref<32xf32, #tpu.memory_space<smem>>
    %216 = vector.broadcast %215 : f32 to vector<4x256xf32>
    %217 = arith.mulf %216, %143 : vector<4x256xf32>
    %218 = arith.addf %214, %217 : vector<4x256xf32>
    %c30 = arith.constant 30 : index
    %219 = memref.load %arg1[%c30] : memref<32xf32, #tpu.memory_space<smem>>
    %220 = vector.broadcast %219 : f32 to vector<4x256xf32>
    %221 = arith.mulf %220, %150 : vector<4x256xf32>
    %222 = arith.addf %218, %221 : vector<4x256xf32>
    %c31 = arith.constant 31 : index
    %223 = memref.load %arg1[%c31] : memref<32xf32, #tpu.memory_space<smem>>
    %224 = vector.broadcast %223 : f32 to vector<4x256xf32>
    %225 = arith.mulf %224, %157 : vector<4x256xf32>
    %226 = arith.addf %222, %225 : vector<4x256xf32>
    %cst_38 = arith.constant 1.000000e-01 : f32
    %227 = vector.broadcast %cst_38 : f32 to vector<4x256xf32>
    %228 = arith.mulf %227, %226 : vector<4x256xf32>
    %229 = arith.maximumf %226, %228 : vector<4x256xf32>
    %cst_39 = arith.constant dense<0.000000e+00> : vector<4xf32>
    %230 = vector.multi_reduction <add>, %175, %cst_39 [1] : vector<4x256xf32> to vector<4xf32>
    %231 = vector.shape_cast %230 : vector<4xf32> to vector<4x1xf32>
    %232 = arith.mulf %175, %175 : vector<4x256xf32>
    %cst_40 = arith.constant dense<0.000000e+00> : vector<4xf32>
    %233 = vector.multi_reduction <add>, %232, %cst_40 [1] : vector<4x256xf32> to vector<4xf32>
    %234 = vector.shape_cast %233 : vector<4xf32> to vector<4x1xf32>
    %cst_41 = arith.constant dense<0.000000e+00> : vector<4xf32>
    %235 = vector.multi_reduction <add>, %193, %cst_41 [1] : vector<4x256xf32> to vector<4xf32>
    %236 = vector.shape_cast %235 : vector<4xf32> to vector<4x1xf32>
    %237 = arith.addf %231, %236 : vector<4x1xf32>
    %238 = arith.mulf %193, %193 : vector<4x256xf32>
    %cst_42 = arith.constant dense<0.000000e+00> : vector<4xf32>
    %239 = vector.multi_reduction <add>, %238, %cst_42 [1] : vector<4x256xf32> to vector<4xf32>
    %240 = vector.shape_cast %239 : vector<4xf32> to vector<4x1xf32>
    %241 = arith.addf %234, %240 : vector<4x1xf32>
    %cst_43 = arith.constant dense<0.000000e+00> : vector<4xf32>
    %242 = vector.multi_reduction <add>, %211, %cst_43 [1] : vector<4x256xf32> to vector<4xf32>
    %243 = vector.shape_cast %242 : vector<4xf32> to vector<4x1xf32>
    %244 = arith.addf %237, %243 : vector<4x1xf32>
    %245 = arith.mulf %211, %211 : vector<4x256xf32>
    %cst_44 = arith.constant dense<0.000000e+00> : vector<4xf32>
    %246 = vector.multi_reduction <add>, %245, %cst_44 [1] : vector<4x256xf32> to vector<4xf32>
    %247 = vector.shape_cast %246 : vector<4xf32> to vector<4x1xf32>
    %248 = arith.addf %241, %247 : vector<4x1xf32>
    %cst_45 = arith.constant dense<0.000000e+00> : vector<4xf32>
    %249 = vector.multi_reduction <add>, %229, %cst_45 [1] : vector<4x256xf32> to vector<4xf32>
    %250 = vector.shape_cast %249 : vector<4xf32> to vector<4x1xf32>
    %251 = arith.addf %244, %250 : vector<4x1xf32>
    %252 = arith.mulf %229, %229 : vector<4x256xf32>
    %cst_46 = arith.constant dense<0.000000e+00> : vector<4xf32>
    %253 = vector.multi_reduction <add>, %252, %cst_46 [1] : vector<4x256xf32> to vector<4xf32>
    %254 = vector.shape_cast %253 : vector<4xf32> to vector<4x1xf32>
    %255 = arith.addf %248, %254 : vector<4x1xf32>
    %cst_47 = arith.constant 9.765625E-4 : f32
    %256 = vector.broadcast %cst_47 : f32 to vector<4x1xf32>
    %257 = arith.mulf %251, %256 : vector<4x1xf32>
    %cst_48 = arith.constant 9.765625E-4 : f32
    %258 = vector.broadcast %cst_48 : f32 to vector<4x1xf32>
    %259 = arith.mulf %255, %258 : vector<4x1xf32>
    %260 = arith.mulf %257, %257 : vector<4x1xf32>
    %261 = arith.subf %259, %260 : vector<4x1xf32>
    %cst_49 = arith.constant 9.99999974E-6 : f32
    %262 = vector.broadcast %cst_49 : f32 to vector<4x1xf32>
    %263 = arith.addf %261, %262 : vector<4x1xf32>
    %264 = math.rsqrt %263 : vector<4x1xf32>
    %265 = arith.mulf %2, %264 : vector<4x1xf32>
    %266 = arith.mulf %257, %265 : vector<4x1xf32>
    %267 = arith.subf %3, %266 : vector<4x1xf32>
    %268 = vector.broadcast %265 : vector<4x1xf32> to vector<4x256xf32>
    %269 = arith.mulf %175, %268 : vector<4x256xf32>
    %270 = vector.broadcast %267 : vector<4x1xf32> to vector<4x256xf32>
    %271 = arith.addf %269, %270 : vector<4x256xf32>
    %272 = arith.addf %271, %4 : vector<4x256xf32>
    %c0_50 = arith.constant 0 : index
    %c0_51 = arith.constant 0 : index
    %273 = vector.load %arg3[%c0_50, %c0_51] : memref<4x1024xf32, #tpu.memory_space<vmem>>, vector<4x256xf32>
    tpu.vector_store %arg3[%c0_50, %c0_51], %272 {strides = array<i32>} : memref<4x1024xf32, #tpu.memory_space<vmem>>, vector<4x256xf32>,
    %274 = vector.broadcast %265 : vector<4x1xf32> to vector<4x256xf32>
    %275 = arith.mulf %193, %274 : vector<4x256xf32>
    %276 = vector.broadcast %267 : vector<4x1xf32> to vector<4x256xf32>
    %277 = arith.addf %275, %276 : vector<4x256xf32>
    %278 = arith.addf %277, %5 : vector<4x256xf32>
    %c0_52 = arith.constant 0 : index
    %c256_53 = arith.constant 256 : index
    %279 = vector.load %arg3[%c0_52, %c256_53] : memref<4x1024xf32, #tpu.memory_space<vmem>>, vector<4x256xf32>
    tpu.vector_store %arg3[%c0_52, %c256_53], %278 {strides = array<i32>} : memref<4x1024xf32, #tpu.memory_space<vmem>>, vector<4x256xf32>,
    %280 = vector.broadcast %265 : vector<4x1xf32> to vector<4x256xf32>
    %281 = arith.mulf %211, %280 : vector<4x256xf32>
    %282 = vector.broadcast %267 : vector<4x1xf32> to vector<4x256xf32>
    %283 = arith.addf %281, %282 : vector<4x256xf32>
    %284 = arith.addf %283, %6 : vector<4x256xf32>
    %c0_54 = arith.constant 0 : index
    %c512_55 = arith.constant 512 : index
    %285 = vector.load %arg3[%c0_54, %c512_55] : memref<4x1024xf32, #tpu.memory_space<vmem>>, vector<4x256xf32>
    tpu.vector_store %arg3[%c0_54, %c512_55], %284 {strides = array<i32>} : memref<4x1024xf32, #tpu.memory_space<vmem>>, vector<4x256xf32>,
    %286 = vector.broadcast %265 : vector<4x1xf32> to vector<4x256xf32>
    %287 = arith.mulf %229, %286 : vector<4x256xf32>
    %288 = vector.broadcast %267 : vector<4x1xf32> to vector<4x256xf32>
    %289 = arith.addf %287, %288 : vector<4x256xf32>
    %290 = arith.addf %289, %7 : vector<4x256xf32>
    %c0_56 = arith.constant 0 : index
    %c768_57 = arith.constant 768 : index
    %291 = vector.load %arg3[%c0_56, %c768_57] : memref<4x1024xf32, #tpu.memory_space<vmem>>, vector<4x256xf32>
    tpu.vector_store %arg3[%c0_56, %c768_57], %290 {strides = array<i32>} : memref<4x1024xf32, #tpu.memory_space<vmem>>, vector<4x256xf32>,
    return
  }
}

</mosaic_0001>

<llo_original>
// kernel: residual_block.1
$region0: #{residual_block.1}
  #allocation0 [shape = 'u32[]', space=smem, size = 0x4, offset = 0x4, fixed_abs, tag = 'smem constant byte address 0x4 - core index']
  #allocation1 [shape = 'u32[144,128]{1,0:T(1,128)}', space=vmem, size = 0x12000, scoped, tag = 'internal scratch']
  %s0 = inlined_call_operand.vmem [shape: f32[4,1024], index: 0, kind: input, shape index: {}]
  %s1 = inlined_call_operand.vmem [shape: f32[32], index: 1, kind: input, shape index: {}]
  %s2 = inlined_call_operand.vmem [shape: f32[4,4], index: 2, kind: input, shape index: {}]
  %s3 = inlined_call_operand.vmem [shape: f32[4,1024], index: 3, kind: output, shape index: {}]
  %s4 = sld [smem:[#allocation0]]
  $region26: #{residual_block.1} parent=0
    _
  %s6 = ssub.s32 1, %s4
  %s7 = scalar_select 0, %s6, %s4
  $region1: #{residual_block.1} parent=0
    #allocation2 [shape = 'u8[512]{0}', space=smem, size = 0x200, scoped, tag = 'input window, operand 1, single buffered']
    #allocation3 [shape = 's32[1]{0}', space=sflag, size = 0x4, scoped, tag = 'scoped memory for residual_block.1']
    %8 = vsyncpa [#allocation3], 0
    // Predicated region
    $region2: #{residual_block.1} parent=1 // pred_check
      _
    $region3: #{residual_block.1} parent=1 // pred_check_branch
      %10 = sbr.rel (0) target = $region5
    $region4: #{residual_block.1} parent=1 // pred_region
      _
    $region5: #{residual_block.1} parent=1 // pred_fallthru
      _
    // Predicated region
    $region6: #{residual_block.1} parent=1 // pred_check
      _
    $region7: #{residual_block.1} parent=1 // pred_check_branch
      %12 = sbr.rel (0) target = $region9
    $region8: #{residual_block.1} parent=1 // pred_region
      %s14 = ssub.s32 16, 16
      %15 = vsyncadd [#allocation3], %s14
      %s17 = sshll.u32 %s1, 4
      %s18 = int_to_ptr.vmem [resolvable:$true] %s17
      %20 = dma.vmem_to_smem %s18, 16, [#allocation2], [#allocation3]
    $region9: #{residual_block.1} parent=1 // pred_fallthru
      _
    // Predicated region
    $region10: #{residual_block.1} parent=1 // pred_check
      _
    $region11: #{residual_block.1} parent=1 // pred_check_branch
      %22 = sbr.rel (0) target = $region13
    $region12: #{residual_block.1} parent=1 // pred_region
      _
    $region13: #{residual_block.1} parent=1 // pred_fallthru
      _
    // Predicated region
    $region14: #{residual_block.1} parent=1 // pred_check
      _
    $region15: #{residual_block.1} parent=1 // pred_check_branch
      %24 = sbr.rel (0) target = $region17
    $region16: #{residual_block.1} parent=1 // pred_region
      %25 = dma.done [#allocation3], 16
    $region17: #{residual_block.1} parent=1 // pred_fallthru
      _
    %26 = sfence
    %v27 = vld [vmem:[%s2] sm:$0xf]
    %v28 = vld [vmem:[%s0] sm:$0xff]
    %v29 = vld [vmem:[%s0 + $0x8] sm:$0xff]
    %v30 = vld [vmem:[%s0 + $0x10] sm:$0xff]
    %v31 = vld [vmem:[%s0 + $0x18] sm:$0xff]
    %v32 = vmul.f32 %v28, 0.1
    %v33 = vmax.f32 %v28, %v32
    %v34 = vmul.f32 %v29, 0.1
    %v35 = vmax.f32 %v29, %v34
    %v36 = vmul.f32 %v30, 0.1
    %v37 = vmax.f32 %v30, %v36
    %v38 = vmul.f32 %v31, 0.1
    %v39 = vmax.f32 %v31, %v38
    %s40 = sld [smem:[#allocation2]]
    %v41 = vstv %s40
    %v42 = vmul.f32 %v41, %v33
    %s43 = sld [smem:[#allocation2 + $0x1]]
    %v44 = vstv %s43
    %v45 = vmul.f32 %v44, %v35
    %v46 = vadd.f32 %v42, %v45
    %s47 = sld [smem:[#allocation2 + $0x2]]
    %v48 = vstv %s47
    %v49 = vmul.f32 %v48, %v37
    %v50 = vadd.f32 %v46, %v49
    %s51 = sld [smem:[#allocation2 + $0x3]]
    %v52 = vstv %s51
    %v53 = vmul.f32 %v52, %v39
    %v54 = vadd.f32 %v50, %v53
    %v55 = vmul.f32 %v54, 0.1
    %v56 = vmax.f32 %v54, %v55
    %s57 = sld [smem:[#allocation2 + $0x4]]
    %v58 = vstv %s57
    %v59 = vmul.f32 %v58, %v33
    %s60 = sld [smem:[#allocation2 + $0x5]]
    %v61 = vstv %s60
    %v62 = vmul.f32 %v61, %v35
    %v63 = vadd.f32 %v59, %v62
    %s64 = sld [smem:[#allocation2 + $0x6]]
    %v65 = vstv %s64
    %v66 = vmul.f32 %v65, %v37
    %v67 = vadd.f32 %v63, %v66
    %s68 = sld [smem:[#allocation2 + $0x7]]
    %v69 = vstv %s68
    %v70 = vmul.f32 %v69, %v39
    %v71 = vadd.f32 %v67, %v70
    %v72 = vmul.f32 %v71, 0.1
    %v73 = vmax.f32 %v71, %v72
    %s74 = sld [smem:[#allocation2 + $0x8]]
    %v75 = vstv %s74
    %v76 = vmul.f32 %v75, %v33
    %s77 = sld [smem:[#allocation2 + $0x9]]
    %v78 = vstv %s77
    %v79 = vmul.f32 %v78, %v35
    %v80 = vadd.f32 %v76, %v79
    %s81 = sld [smem:[#allocation2 + $0xa]]
    %v82 = vstv %s81
    %v83 = vmul.f32 %v82, %v37
    %v84 = vadd.f32 %v80, %v83
    %s85 = sld [smem:[#allocation2 + $0xb]]
    %v86 = vstv %s85
    %v87 = vmul.f32 %v86, %v39
    %v88 = vadd.f32 %v84, %v87
    %v89 = vmul.f32 %v88, 0.1
    %v90 = vmax.f32 %v88, %v89
    %s91 = sld [smem:[#allocation2 + $0xc]]
    %v92 = vstv %s91
    %v93 = vmul.f32 %v92, %v33
    %s94 = sld [smem:[#allocation2 + $0xd]]
    %v95 = vstv %s94
    %v96 = vmul.f32 %v95, %v35
    %v97 = vadd.f32 %v93, %v96
    %s98 = sld [smem:[#allocation2 + $0xe]]
    %v99 = vstv %s98
    %v100 = vmul.f32 %v99, %v37
    %v101 = vadd.f32 %v97, %v100
    %s102 = sld [smem:[#allocation2 + $0xf]]
    %v103 = vstv %s102
    %v104 = vmul.f32 %v103, %v39
    %v105 = vadd.f32 %v101, %v104
    %v106 = vmul.f32 %v105, 0.1
    %v107 = vmax.f32 %v105, %v106
    %v109 = vcombine.high %v56, %v56
    %vm111 = vcmask 1043456
    %v112 = vsel %vm111, %v56, 0.0
    %v113 = vsel %vm111, %v109, 0.0
    %v114 = vadd.f32 %v112, %v113
    %115 = vadd.xlane.f32.xlu0 %v114
    %v116 = vpop.xlane.xlu0 %115
    %v117 = vmul.f32 %v56, %v56
    %v119 = vcombine.high %v117, %v117
    %v121 = vsel %vm111, %v117, 0.0
    %v122 = vsel %vm111, %v119, 0.0
    %v123 = vadd.f32 %v121, %v122
    %124 = vadd.xlane.f32.xlu0 %v123
    %v125 = vpop.xlane.xlu0 %124
    %v127 = vcombine.high %v73, %v73
    %v129 = vsel %vm111, %v73, 0.0
    %v130 = vsel %vm111, %v127, 0.0
    %v131 = vadd.f32 %v129, %v130
    %132 = vadd.xlane.f32.xlu0 %v131
    %v133 = vpop.xlane.xlu0 %132
    %v134 = vadd.f32 %v116, %v133
    %v135 = vmul.f32 %v73, %v73
    %v137 = vcombine.high %v135, %v135
    %v139 = vsel %vm111, %v135, 0.0
    %v140 = vsel %vm111, %v137, 0.0
    %v141 = vadd.f32 %v139, %v140
    %142 = vadd.xlane.f32.xlu0 %v141
    %v143 = vpop.xlane.xlu0 %142
    %v144 = vadd.f32 %v125, %v143
    %v146 = vcombine.high %v90, %v90
    %v148 = vsel %vm111, %v90, 0.0
    %v149 = vsel %vm111, %v146, 0.0
    %v150 = vadd.f32 %v148, %v149
    %151 = vadd.xlane.f32.xlu0 %v150
    %v152 = vpop.xlane.xlu0 %151
    %v153 = vadd.f32 %v134, %v152
    %v154 = vmul.f32 %v90, %v90
    %v156 = vcombine.high %v154, %v154
    %v158 = vsel %vm111, %v154, 0.0
    %v159 = vsel %vm111, %v156, 0.0
    %v160 = vadd.f32 %v158, %v159
    %161 = vadd.xlane.f32.xlu0 %v160
    %v162 = vpop.xlane.xlu0 %161
    %v163 = vadd.f32 %v144, %v162
    %v165 = vcombine.high %v107, %v107
    %v167 = vsel %vm111, %v107, 0.0
    %v168 = vsel %vm111, %v165, 0.0
    %v169 = vadd.f32 %v167, %v168
    %170 = vadd.xlane.f32.xlu0 %v169
    %v171 = vpop.xlane.xlu0 %170
    %v172 = vadd.f32 %v153, %v171
    %v173 = vmul.f32 %v107, %v107
    %v175 = vcombine.high %v173, %v173
    %v177 = vsel %vm111, %v173, 0.0
    %v178 = vsel %vm111, %v175, 0.0
    %v179 = vadd.f32 %v177, %v178
    %180 = vadd.xlane.f32.xlu0 %v179
    %v181 = vpop.xlane.xlu0 %180
    %v182 = vadd.f32 %v163, %v181
    %v183 = vmul.f32 %v172, 0.0009765625
    %v184 = vmul.f32 %v182, 0.0009765625
    %v185 = vmul.f32 %v183, %v183
    %v186 = vsub.f32 %v184, %v185
    %v187 = vadd.f32 %v186, 1e-05
    %v188 = vrsqrt.pop %v187
    %v189 = vmul.f32 %v27, %v188
    %v190 = vmul.f32 %v183, %v189
    %192 = vrot.lane.b32.xlu0 %v190, 1
    %v193 = vpop.permute.xlu0 %192
    %v195 = vsub.f32 %v27, %v193
    %197 = vset.pattern.permute.xlu0 0
    %198 = vperm.xlu0 %197, %v189
    %v199 = vpop.permute.xlu0 %198
    %v201 = vunpack.c.l.s4 839922192
    %v202 = vunpack.c.0.s8 %v201
    %v203 = vlaneseq
    %v204 = vshrl.u32 %v203, 7
    %v205 = vsub.s32 %v202, %v204
    %v206 = vrot.slane %v199, %v205
    %v208 = vmul.f32 %v56, %v206
    %210 = vset.pattern.permute.xlu0 1
    %211 = vperm.xlu0 %210, %v195
    %v212 = vpop.permute.xlu0 %211
    %v214 = vunpack.c.l.s4 839922192
    %v215 = vunpack.c.0.s8 %v214
    %v216 = vlaneseq
    %v217 = vshrl.u32 %v216, 7
    %v218 = vsub.s32 %v215, %v217
    %v219 = vrot.slane %v212, %v218
    %v221 = vadd.f32 %v208, %v219
    %v222 = vmul.f32 %v221, 0.1
    %v223 = vmax.f32 %v221, %v222
    %v224 = vmul.f32 %v73, %v206
    %v225 = vadd.f32 %v224, %v219
    %v226 = vmul.f32 %v225, 0.1
    %v227 = vmax.f32 %v225, %v226
    %v228 = vmul.f32 %v90, %v206
    %v229 = vadd.f32 %v228, %v219
    %v230 = vmul.f32 %v229, 0.1
    %v231 = vmax.f32 %v229, %v230
    %v232 = vmul.f32 %v107, %v206
    %v233 = vadd.f32 %v232, %v219
    %v234 = vmul.f32 %v233, 0.1
    %v235 = vmax.f32 %v233, %v234
    %s236 = sld [smem:[#allocation2 + $0x10]]
    %v237 = vstv %s236
    %v238 = vmul.f32 %v237, %v223
    %s239 = sld [smem:[#allocation2 + $0x11]]
    %v240 = vstv %s239
    %v241 = vmul.f32 %v240, %v227
    %v242 = vadd.f32 %v238, %v241
    %s243 = sld [smem:[#allocation2 + $0x12]]
    %v244 = vstv %s243
    %v245 = vmul.f32 %v244, %v231
    %v246 = vadd.f32 %v242, %v245
    %s247 = sld [smem:[#allocation2 + $0x13]]
    %v248 = vstv %s247
    %v249 = vmul.f32 %v248, %v235
    %v250 = vadd.f32 %v246, %v249
    %v251 = vmul.f32 %v250, 0.1
    %v252 = vmax.f32 %v250, %v251
    %s253 = sld [smem:[#allocation2 + $0x14]]
    %v254 = vstv %s253
    %v255 = vmul.f32 %v254, %v223
    %s256 = sld [smem:[#allocation2 + $0x15]]
    %v257 = vstv %s256
    %v258 = vmul.f32 %v257, %v227
    %v259 = vadd.f32 %v255, %v258
    %s260 = sld [smem:[#allocation2 + $0x16]]
    %v261 = vstv %s260
    %v262 = vmul.f32 %v261, %v231
    %v263 = vadd.f32 %v259, %v262
    %s264 = sld [smem:[#allocation2 + $0x17]]
    %v265 = vstv %s264
    %v266 = vmul.f32 %v265, %v235
    %v267 = vadd.f32 %v263, %v266
    %v268 = vmul.f32 %v267, 0.1
    %v269 = vmax.f32 %v267, %v268
    %s270 = sld [smem:[#allocation2 + $0x18]]
    %v271 = vstv %s270
    %v272 = vmul.f32 %v271, %v223
    %s273 = sld [smem:[#allocation2 + $0x19]]
    %v274 = vstv %s273
    %v275 = vmul.f32 %v274, %v227
    %v276 = vadd.f32 %v272, %v275
    %s277 = sld [smem:[#allocation2 + $0x1a]]
    %v278 = vstv %s277
    %v279 = vmul.f32 %v278, %v231
    %v280 = vadd.f32 %v276, %v279
    %s281 = sld [smem:[#allocation2 + $0x1b]]
    %v282 = vstv %s281
    %v283 = vmul.f32 %v282, %v235
    %v284 = vadd.f32 %v280, %v283
    %v285 = vmul.f32 %v284, 0.1
    %v286 = vmax.f32 %v284, %v285
    %s287 = sld [smem:[#allocation2 + $0x1c]]
    %v288 = vstv %s287
    %v289 = vmul.f32 %v288, %v223
    %s290 = sld [smem:[#allocation2 + $0x1d]]
    %v291 = vstv %s290
    %v292 = vmul.f32 %v291, %v227
    %v293 = vadd.f32 %v289, %v292
    %s294 = sld [smem:[#allocation2 + $0x1e]]
    %v295 = vstv %s294
    %v296 = vmul.f32 %v295, %v231
    %v297 = vadd.f32 %v293, %v296
    %s298 = sld [smem:[#allocation2 + $0x1f]]
    %v299 = vstv %s298
    %v300 = vmul.f32 %v299, %v235
    %v301 = vadd.f32 %v297, %v300
    %v302 = vmul.f32 %v301, 0.1
    %v303 = vmax.f32 %v301, %v302
    %v305 = vcombine.high %v252, %v252
    %v307 = vsel %vm111, %v252, 0.0
    %v308 = vsel %vm111, %v305, 0.0
    %v309 = vadd.f32 %v307, %v308
    %310 = vadd.xlane.f32.xlu0 %v309
    %v311 = vpop.xlane.xlu0 %310
    %v312 = vmul.f32 %v252, %v252
    %v314 = vcombine.high %v312, %v312
    %v316 = vsel %vm111, %v312, 0.0
    %v317 = vsel %vm111, %v314, 0.0
    %v318 = vadd.f32 %v316, %v317
    %319 = vadd.xlane.f32.xlu0 %v318
    %v320 = vpop.xlane.xlu0 %319
    %v322 = vcombine.high %v269, %v269
    %v324 = vsel %vm111, %v269, 0.0
    %v325 = vsel %vm111, %v322, 0.0
    %v326 = vadd.f32 %v324, %v325
    %327 = vadd.xlane.f32.xlu0 %v326
    %v328 = vpop.xlane.xlu0 %327
    %v329 = vadd.f32 %v311, %v328
    %v330 = vmul.f32 %v269, %v269
    %v332 = vcombine.high %v330, %v330
    %v334 = vsel %vm111, %v330, 0.0
    %v335 = vsel %vm111, %v332, 0.0
    %v336 = vadd.f32 %v334, %v335
    %337 = vadd.xlane.f32.xlu0 %v336
    %v338 = vpop.xlane.xlu0 %337
    %v339 = vadd.f32 %v320, %v338
    %v341 = vcombine.high %v286, %v286
    %v343 = vsel %vm111, %v286, 0.0
    %v344 = vsel %vm111, %v341, 0.0
    %v345 = vadd.f32 %v343, %v344
    %346 = vadd.xlane.f32.xlu0 %v345
    %v347 = vpop.xlane.xlu0 %346
    %v348 = vadd.f32 %v329, %v347
    %v349 = vmul.f32 %v286, %v286
    %v351 = vcombine.high %v349, %v349
    %v353 = vsel %vm111, %v349, 0.0
    %v354 = vsel %vm111, %v351, 0.0
    %v355 = vadd.f32 %v353, %v354
    %356 = vadd.xlane.f32.xlu0 %v355
    %v357 = vpop.xlane.xlu0 %356
    %v358 = vadd.f32 %v339, %v357
    %v360 = vcombine.high %v303, %v303
    %v362 = vsel %vm111, %v303, 0.0
    %v363 = vsel %vm111, %v360, 0.0
    %v364 = vadd.f32 %v362, %v363
    %365 = vadd.xlane.f32.xlu0 %v364
    %v366 = vpop.xlane.xlu0 %365
    %v367 = vadd.f32 %v348, %v366
    %v368 = vmul.f32 %v303, %v303
    %v370 = vcombine.high %v368, %v368
    %v372 = vsel %vm111, %v368, 0.0
    %v373 = vsel %vm111, %v370, 0.0
    %v374 = vadd.f32 %v372, %v373
    %375 = vadd.xlane.f32.xlu0 %v374
    %v376 = vpop.xlane.xlu0 %375
    %v377 = vadd.f32 %v358, %v376
    %v378 = vmul.f32 %v367, 0.0009765625
    %v379 = vmul.f32 %v377, 0.0009765625
    %v380 = vmul.f32 %v378, %v378
    %v381 = vsub.f32 %v379, %v380
    %v382 = vadd.f32 %v381, 1e-05
    %v383 = vrsqrt.pop %v382
    %v384 = vmul.f32 %v27, %v383
    %v385 = vmul.f32 %v378, %v384
    %387 = vrot.lane.b32.xlu0 %v385, 1
    %v388 = vpop.permute.xlu0 %387
    %v390 = vsub.f32 %v27, %v388
    %392 = vset.pattern.permute.xlu0 2
    %393 = vperm.xlu0 %392, %v384
    %v394 = vpop.permute.xlu0 %393
    %v396 = vunpack.c.l.s4 839922192
    %v397 = vunpack.c.0.s8 %v396
    %v398 = vlaneseq
    %v399 = vshrl.u32 %v398, 7
    %v400 = vsub.s32 %v397, %v399
    %v401 = vrot.slane %v394, %v400
    %v403 = vmul.f32 %v252, %v401
    %405 = vset.pattern.permute.xlu0 3
    %406 = vperm.xlu0 %405, %v390
    %v407 = vpop.permute.xlu0 %406
    %v409 = vunpack.c.l.s4 839922192
    %v410 = vunpack.c.0.s8 %v409
    %v411 = vlaneseq
    %v412 = vshrl.u32 %v411, 7
    %v413 = vsub.s32 %v410, %v412
    %v414 = vrot.slane %v407, %v413
    %v416 = vadd.f32 %v403, %v414
    %v417 = vadd.f32 %v416, %v28
    %418 = vst [vmem:[%s3] sm:$0xff] %v417
    %v419 = vmul.f32 %v269, %v401
    %v420 = vadd.f32 %v419, %v414
    %v421 = vadd.f32 %v420, %v29
    %422 = vst [vmem:[%s3 + $0x8] sm:$0xff] %v421
    %v423 = vmul.f32 %v286, %v401
    %v424 = vadd.f32 %v423, %v414
    %v425 = vadd.f32 %v424, %v30
    %426 = vst [vmem:[%s3 + $0x10] sm:$0xff] %v425
    %v427 = vmul.f32 %v303, %v401
    %v428 = vadd.f32 %v427, %v414
    %v429 = vadd.f32 %v428, %v31
    %430 = vst [vmem:[%s3 + $0x18] sm:$0xff] %v429
    // Predicated region
    $region18: #{residual_block.1} parent=1 // pred_check
      _
    $region19: #{residual_block.1} parent=1 // pred_check_branch
      %432 = sbr.rel (0) target = $region21
    $region20: #{residual_block.1} parent=1 // pred_region
      _
    $region21: #{residual_block.1} parent=1 // pred_fallthru
      _
    // Predicated region
    $region22: #{residual_block.1} parent=1 // pred_check
      _
    $region23: #{residual_block.1} parent=1 // pred_check_branch
      %434 = sbr.rel (0) target = $region25
    $region24: #{residual_block.1} parent=1 // pred_region
      _
    $region25: #{residual_block.1} parent=1 // pred_fallthru
      _
    %435 = vsyncpa [#allocation3], 1

</llo_original>
